<compile_context>
chip_gen: v7x
topology: tpu7x:2x2x1
jax: 0.10.0
libtpu: 0.0.40
codegen_flags: <defaults>
</compile_context>

<pallas_src>
import jax
import jax.numpy as jnp
from jax.experimental import pallas as pl
from jax.experimental.pallas import tpu as pltpu

# ---------------- model dimensions (small, consistent with the module) -------
BATCH = 2
NUM_FRAMES = 4          # module default is 30; small for the demo
CHANNELS = 3
HEIGHT = 16
WIDTH = 16
BACKBONE_DIM = 128      # stand-in for 2048 (resnet50) backbone output dim
FEATURE_DIM = 128       # VideoFeatureExtractor(feature_dim=...)
HIDDEN_DIM = 512        # classifier hidden: nn.Linear(feature_dim, 512)
NUM_CLASSES = 10
NC_PAD = 128            # lane-dense padded logits width (multiple of 128)
BN_EPS = 1e-5


# --------------------------------- kernel ------------------------------------
def head_kernel(x_ref, wh_ref, bh_ref, w2_ref, b2_ref, out_ref):
    """Whole forward pass, fused.

    x_ref : (B, T, C, H*W) f32   raw frames (trailing-dim reshape only)
    wh_ref: (C, HIDDEN_DIM) bf16 stem @ proj @ eval-BN @ classifier-w1, folded
    bh_ref: (1, HIDDEN_DIM) f32  matching folded bias
    w2_ref: (HIDDEN_DIM, NC_PAD) bf16 ; b2_ref: (1, NC_PAD) f32  (zero-padded)
    out_ref: (B, NC_PAD) f32     lane-dense padded logits
    """
    x = x_ref[...]                                   # (B, T, C, HW) f32
    t_dim = x.shape[1]
    hw = x.shape[-1]

    # Temporal sum: unrolled vreg adds over the (small, static) frame axis.
    acc = x[:, 0]                                    # (B, C, HW)
    for t in range(1, t_dim):
        acc = acc + x[:, t]
    # Spatial mean (lane reduce, XLU) with the 1/T factor folded in.
    pooled = jnp.sum(acc, axis=-1) * (1.0 / (t_dim * hw))          # (B, C) f32

    # Folded stem + projection + eval-BN + classifier layer 1, then ReLU.
    # (Dropout is identity in eval mode.)
    h = jnp.dot(pooled.astype(jnp.bfloat16), wh_ref[...],
                preferred_element_type=jnp.float32) + bh_ref[...]  # (B, HIDDEN)
    h = jnp.maximum(h, 0.0)

    # Classifier layer 2 into the lane-dense padded logits block.
    logits = jnp.dot(h.astype(jnp.bfloat16), w2_ref[...],
                     preferred_element_type=jnp.float32) + b2_ref[...]  # (B, NC_PAD)
    out_ref[...] = logits


# --------------------------------- wrapper -----------------------------------
def classification_model(frames, folded):
    """frames: (B, T, C, H, W) float32 -> logits: (B, NUM_CLASSES) float32."""
    B, T, C, H, W = frames.shape

    # Free trailing-dim reshape (no copy); pooling itself happens in-kernel.
    x = frames.astype(jnp.float32).reshape(B, T, C, H * W)

    args = (x, folded["w_head"], folded["b_head"], folded["w2"], folded["b2"])

    flops = (B * T * C * H * W                                   # pooling adds
             + 2 * B * (C * HIDDEN_DIM + HIDDEN_DIM * NC_PAD))   # two matmuls
    bytes_accessed = sum(int(a.size) * a.dtype.itemsize for a in args) \
        + B * NC_PAD * 4

    vmem = pltpu.MemorySpace.VMEM
    logits_padded = pl.pallas_call(
        head_kernel,
        out_shape=jax.ShapeDtypeStruct((B, NC_PAD), jnp.float32),
        in_specs=[pl.BlockSpec(memory_space=vmem) for _ in args],
        out_specs=pl.BlockSpec(memory_space=vmem),
        cost_estimate=pl.CostEstimate(flops=flops, transcendentals=0,
                                      bytes_accessed=bytes_accessed),
    )(*args)

    return logits_padded[:, :NUM_CLASSES]


# ------------------------------ parameter init --------------------------------
def init_params(key):
    ks = jax.random.split(key, 8)

    def linear(k, fan_in, shape):
        bound = 1.0 / (fan_in ** 0.5)
        return jax.random.uniform(k, shape, jnp.float32, -bound, bound)

    # BatchNorm1d defaults in eval mode collapse to: scale=1/sqrt(1+eps), shift=0
    bn_scale = jnp.full((1, FEATURE_DIM), 1.0 / jnp.sqrt(1.0 + BN_EPS), jnp.float32)
    bn_shift = jnp.zeros((1, FEATURE_DIM), jnp.float32)

    return dict(
        w_stem=linear(ks[0], CHANNELS, (CHANNELS, BACKBONE_DIM)),
        b_stem=linear(ks[1], CHANNELS, (1, BACKBONE_DIM)),
        w_proj=linear(ks[2], BACKBONE_DIM, (BACKBONE_DIM, FEATURE_DIM)),
        b_proj=linear(ks[3], BACKBONE_DIM, (1, FEATURE_DIM)),
        bn_scale=bn_scale,
        bn_shift=bn_shift,
        w1=linear(ks[4], FEATURE_DIM, (FEATURE_DIM, HIDDEN_DIM)),
        b1=linear(ks[5], FEATURE_DIM, (1, HIDDEN_DIM)),
        w2=linear(ks[6], HIDDEN_DIM, (HIDDEN_DIM, NUM_CLASSES)),
        b2=linear(ks[7], HIDDEN_DIM, (1, NUM_CLASSES)),
    )


def fold_params(params):
    """One-time algebraic folding. Exact for eval mode + linear stand-in backbone.

    All folds are done in float32 and cast to bf16 once at the end to avoid
    compounding bf16 rounding.
    """
    # stem @ proj folded into a single (C, FEATURE_DIM) matrix + bias.
    w_fold = params["w_stem"] @ params["w_proj"]                          # (C, F)
    b_fold = params["b_stem"] @ params["w_proj"] + params["b_proj"]       # (1, F)

    # eval-mode BatchNorm1d is a per-feature affine after the temporal mean.
    w_fold = w_fold * params["bn_scale"]
    b_fold = b_fold * params["bn_scale"] + params["bn_shift"]

    # Fold the result into the first classifier layer (ReLU comes only after w1).
    w_head = w_fold @ params["w1"]                                        # (C, HIDDEN)
    b_head = b_fold @ params["w1"] + params["b1"]                         # (1, HIDDEN)

    # Zero-pad the final classifier to a lane-dense (HIDDEN_DIM, 128) output.
    w2p = jnp.zeros((HIDDEN_DIM, NC_PAD), jnp.float32).at[:, :NUM_CLASSES].set(params["w2"])
    b2p = jnp.zeros((1, NC_PAD), jnp.float32).at[:, :NUM_CLASSES].set(params["b2"])

    return dict(
        w_head=w_head.astype(jnp.bfloat16),
        b_head=b_head.astype(jnp.float32),
        w2=w2p.astype(jnp.bfloat16),
        b2=b2p.astype(jnp.float32),
    )


# ----------------------------------- main --------------------------------------
if __name__ == "__main__":
    key = jax.random.PRNGKey(0)
    k_data, k_params = jax.random.split(key)

    frames = jax.random.normal(
        k_data, (BATCH, NUM_FRAMES, CHANNELS, HEIGHT, WIDTH), dtype=jnp.float32)
    params = init_params(k_params)
    folded = fold_params(params)

    logits = jax.jit(classification_model)(frames, folded)
    logits = jax.block_until_ready(logits)

    assert logits.shape == (BATCH, NUM_CLASSES), logits.shape
    assert logits.dtype == jnp.float32
    assert bool(jnp.all(jnp.isfinite(logits)))
    print("KERNEL_OK")
</pallas_src>

<mosaic_0001>
module attributes {stable_mosaic.version = 11 : i64} {
  func.func @head_kernel(%arg0: memref<2x4x3x256xf32, #tpu.memory_space<vmem>>, %arg1: memref<3x512xbf16, #tpu.memory_space<vmem>>, %arg2: memref<1x512xf32, #tpu.memory_space<vmem>>, %arg3: memref<512x128xbf16, #tpu.memory_space<vmem>>, %arg4: memref<1x128xf32, #tpu.memory_space<vmem>>, %arg5: memref<2x128xf32, #tpu.memory_space<vmem>>) attributes {dimension_semantics = [], scalar_prefetch = 0 : i64, scratch_operands = 0 : i64, tpu.core_type = #tpu.core_type<tc>} {
    %c0 = arith.constant 0 : index
    %c0_0 = arith.constant 0 : index
    %c0_1 = arith.constant 0 : index
    %c0_2 = arith.constant 0 : index
    %0 = vector.load %arg0[%c0, %c0_0, %c0_1, %c0_2] : memref<2x4x3x256xf32, #tpu.memory_space<vmem>>, vector<2x4x3x256xf32>
    %1 = vector.extract_strided_slice %0 {offsets = [0, 0, 0, 0], sizes = [2, 1, 3, 256], strides = [1, 1, 1, 1]} : vector<2x4x3x256xf32> to vector<2x1x3x256xf32>
    %2 = vector.shape_cast %1 : vector<2x1x3x256xf32> to vector<2x3x256xf32>
    %3 = vector.extract_strided_slice %0 {offsets = [0, 1, 0, 0], sizes = [2, 1, 3, 256], strides = [1, 1, 1, 1]} : vector<2x4x3x256xf32> to vector<2x1x3x256xf32>
    %4 = vector.shape_cast %3 : vector<2x1x3x256xf32> to vector<2x3x256xf32>
    %5 = arith.addf %2, %4 : vector<2x3x256xf32>
    %6 = vector.extract_strided_slice %0 {offsets = [0, 2, 0, 0], sizes = [2, 1, 3, 256], strides = [1, 1, 1, 1]} : vector<2x4x3x256xf32> to vector<2x1x3x256xf32>
    %7 = vector.shape_cast %6 : vector<2x1x3x256xf32> to vector<2x3x256xf32>
    %8 = arith.addf %5, %7 : vector<2x3x256xf32>
    %9 = vector.extract_strided_slice %0 {offsets = [0, 3, 0, 0], sizes = [2, 1, 3, 256], strides = [1, 1, 1, 1]} : vector<2x4x3x256xf32> to vector<2x1x3x256xf32>
    %10 = vector.shape_cast %9 : vector<2x1x3x256xf32> to vector<2x3x256xf32>
    %11 = arith.addf %8, %10 : vector<2x3x256xf32>
    %cst = arith.constant dense<0.000000e+00> : vector<2x3xf32>
    %12 = vector.multi_reduction <add>, %11, %cst [2] : vector<2x3x256xf32> to vector<2x3xf32>
    %cst_3 = arith.constant 9.765625E-4 : f32
    %13 = vector.broadcast %cst_3 : f32 to vector<2x3xf32>
    %14 = arith.mulf %12, %13 : vector<2x3xf32>
    %15 = arith.truncf %14 : vector<2x3xf32> to vector<2x3xbf16>
    %c0_4 = arith.constant 0 : index
    %c0_5 = arith.constant 0 : index
    %16 = vector.load %arg1[%c0_4, %c0_5] : memref<3x512xbf16, #tpu.memory_space<vmem>>, vector<3x512xbf16>
    %cst_6 = arith.constant dense<0.000000e+00> : vector<2x512xf32>
    %17 = tpu.matmul %15, %16, %cst_6 {dimension_numbers = #tpu.dot_dimension_numbers<[1], [0], [0], [1], [0, 0, 1, 1], [], []>} : vector<2x3xbf16>, vector<3x512xbf16>, vector<2x512xf32> -> vector<2x512xf32>
    %c0_7 = arith.constant 0 : index
    %c0_8 = arith.constant 0 : index
    %18 = vector.load %arg2[%c0_7, %c0_8] : memref<1x512xf32, #tpu.memory_space<vmem>>, vector<1x512xf32>
    %19 = vector.broadcast %18 : vector<1x512xf32> to vector<2x512xf32>
    %20 = arith.addf %17, %19 : vector<2x512xf32>
    %cst_9 = arith.constant 0.000000e+00 : f32
    %21 = vector.broadcast %cst_9 : f32 to vector<2x512xf32>
    %22 = arith.maximumf %20, %21 : vector<2x512xf32>
    %23 = arith.truncf %22 : vector<2x512xf32> to vector<2x512xbf16>
    %c0_10 = arith.constant 0 : index
    %c0_11 = arith.constant 0 : index
    %24 = vector.load %arg3[%c0_10, %c0_11] : memref<512x128xbf16, #tpu.memory_space<vmem>>, vector<512x128xbf16>
    %cst_12 = arith.constant dense<0.000000e+00> : vector<2x128xf32>
    %25 = tpu.matmul %23, %24, %cst_12 {dimension_numbers = #tpu.dot_dimension_numbers<[1], [0], [0], [1], [0, 0, 1, 1], [], []>} : vector<2x512xbf16>, vector<512x128xbf16>, vector<2x128xf32> -> vector<2x128xf32>
    %c0_13 = arith.constant 0 : index
    %c0_14 = arith.constant 0 : index
    %26 = vector.load %arg4[%c0_13, %c0_14] : memref<1x128xf32, #tpu.memory_space<vmem>>, vector<1x128xf32>
    %27 = vector.broadcast %26 : vector<1x128xf32> to vector<2x128xf32>
    %28 = arith.addf %25, %27 : vector<2x128xf32>
    %c0_15 = arith.constant 0 : index
    %c0_16 = arith.constant 0 : index
    %29 = vector.load %arg5[%c0_15, %c0_16] : memref<2x128xf32, #tpu.memory_space<vmem>>, vector<2x128xf32>
    tpu.vector_store %arg5[%c0_15, %c0_16], %28 {strides = array<i32>} : memref<2x128xf32, #tpu.memory_space<vmem>>, vector<2x128xf32>,
    return
  }
}

</mosaic_0001>

<llo_original>
// kernel: classification_model.1
$region0: #{classification_model.1}
  #allocation0 [shape = 'u32[]', space=smem, size = 0x4, offset = 0x4, fixed_abs, tag = 'smem constant byte address 0x4 - core index']
  #allocation1 [shape = 'u32[144,128]{1,0:T(1,128)}', space=vmem, size = 0x12000, scoped, tag = 'internal scratch']
  %s0 = inlined_call_operand.vmem [shape: f32[2,4,3,256], index: 0, kind: input, shape index: {}]
  %s1 = inlined_call_operand.vmem [shape: bf16[3,512], index: 1, kind: input, shape index: {}]
  %s2 = inlined_call_operand.vmem [shape: f32[1,512], index: 2, kind: input, shape index: {}]
  %s3 = inlined_call_operand.vmem [shape: bf16[512,128], index: 3, kind: input, shape index: {}]
  %s4 = inlined_call_operand.vmem [shape: f32[1,128], index: 4, kind: input, shape index: {}]
  %s5 = inlined_call_operand.hbm [shape: f32[2,128], index: 5, kind: output, shape index: {}]
  %s6 = sld [smem:[#allocation0]]
  $region30: #{classification_model.1} parent=0
    _
  %s8 = ssub.s32 1, %s6
  %s9 = scalar_select 0, %s8, %s6
  $region1: #{classification_model.1} parent=0
    #allocation2 [shape = 'u8[1024]{0}', space=vmem, size = 0x400, scoped, tag = 'output window, operand 0, single buffered']
    #allocation3 [shape = 's32[1]{0}', space=sflag, size = 0x4, scoped, tag = 'scoped memory for classification_model.1']
    %10 = vsyncpa [#allocation3], 0
    // Predicated region
    $region2: #{classification_model.1} parent=1 // pred_check
      _
    $region3: #{classification_model.1} parent=1 // pred_check_branch
      %12 = sbr.rel (0) target = $region5
    $region4: #{classification_model.1} parent=1 // pred_region
      _
    $region5: #{classification_model.1} parent=1 // pred_fallthru
      _
    // Predicated region
    $region6: #{classification_model.1} parent=1 // pred_check
      _
    $region7: #{classification_model.1} parent=1 // pred_check_branch
      %14 = sbr.rel (0) target = $region9
    $region8: #{classification_model.1} parent=1 // pred_region
      _
    $region9: #{classification_model.1} parent=1 // pred_fallthru
      _
    // Predicated region
    $region10: #{classification_model.1} parent=1 // pred_check
      _
    $region11: #{classification_model.1} parent=1 // pred_check_branch
      %16 = sbr.rel (0) target = $region13
    $region12: #{classification_model.1} parent=1 // pred_region
      _
    $region13: #{classification_model.1} parent=1 // pred_fallthru
      _
    // Predicated region
    $region14: #{classification_model.1} parent=1 // pred_check
      _
    $region15: #{classification_model.1} parent=1 // pred_check_branch
      %18 = sbr.rel (0) target = $region17
    $region16: #{classification_model.1} parent=1 // pred_region
      _
    $region17: #{classification_model.1} parent=1 // pred_fallthru
      _
    // Predicated region
    $region18: #{classification_model.1} parent=1 // pred_check
      _
    $region19: #{classification_model.1} parent=1 // pred_check_branch
      %20 = sbr.rel (0) target = $region21
    $region20: #{classification_model.1} parent=1 // pred_region
      _
    $region21: #{classification_model.1} parent=1 // pred_fallthru
      _
    %v22 = vld [vmem:[%s0] sm:$0x77]
    %v23 = vld [vmem:[%s0 + $0x8] sm:$0x77]
    %v24 = vld [vmem:[%s0 + $0x10] sm:$0x77]
    %v25 = vld [vmem:[%s0 + $0x18] sm:$0x77]
    %v26 = vld [vmem:[%s0 + $0x20] sm:$0x77]
    %v27 = vld [vmem:[%s0 + $0x28] sm:$0x77]
    %v28 = vld [vmem:[%s0 + $0x30] sm:$0x77]
    %v29 = vld [vmem:[%s0 + $0x38] sm:$0x77]
    %v30 = vadd.f32 %v22, %v23
    %v31 = vadd.f32 %v26, %v27
    %v32 = vadd.f32 %v30, %v24
    %v33 = vadd.f32 %v31, %v28
    %v34 = vadd.f32 %v32, %v25
    %v35 = vadd.f32 %v33, %v29
    %v38 = vcombine.high %v34, %v34
    %v39 = vcombine.high %v35, %v35
    %vm42 = vcmask 1042432
    %v43 = vsel %vm42, %v34, 0.0
    %v44 = vsel %vm42, %v38, 0.0
    %v45 = vadd.f32 %v43, %v44
    %46 = vadd.xlane.f32.xlu0 %v45
    %v47 = vpop.xlane.xlu0 %46
    %v48 = vsel %vm42, %v35, 0.0
    %v49 = vsel %vm42, %v39, 0.0
    %v50 = vadd.f32 %v48, %v49
    %51 = vadd.xlane.f32.xlu0 %v50
    %v52 = vpop.xlane.xlu0 %51
    %v53 = vmul.f32 %v47, 0.0009765625
    %v54 = vmul.f32 %v52, 0.0009765625
    %v55 = vpack.c.bf16 %v53, %v53
    %v56 = vpack.c.bf16 %v54, %v54
    %v57 = vld [vmem:[%s1] sm:$0xff]
    %v58 = vld [vmem:[%s2] sm:$0xf]
    %v60 = vlaneseq
    %v61 = vshrl.u32 %v60, 7
    %v62 = vsub.s32 0, %v61
    %v63 = vrot.slane %v58, %v62
    %v64 = vlaneseq
    %v65 = vshrl.u32 %v64, 7
    %v66 = vsub.s32 1, %v65
    %v67 = vrot.slane %v58, %v66
    %v68 = vlaneseq
    %v69 = vshrl.u32 %v68, 7
    %v70 = vsub.s32 2, %v69
    %v71 = vrot.slane %v58, %v70
    %v72 = vlaneseq
    %v73 = vshrl.u32 %v72, 7
    %v74 = vsub.s32 3, %v73
    %v75 = vrot.slane %v58, %v74
    %v82 = vunpack.c.l.b16 %v55
    %v83 = vunpack.c.l.b16 %v56
    %v84 = vlaneseq
    %v85 = vand.u32 %v84, 127
    %v86 = vlaneseq
    %v87 = vshrl.u32 %v86, 7
    %v88 = vsub.s32 %v85, %v87
    %v89 = vrot.slane %v82, %v88
    %v90 = vlaneseq
    %v91 = vshrl.u32 %v90, 7
    %v92 = vsub.s32 %v85, %v91
    %v93 = vrot.slane %v83, %v92
    %vm94 = vcmask 1041409
    %v95 = vsel %vm94, %v93, %v89
    %v96 = vpack.c.b16 %v95, %v95
    %v98 = vcombine.high %v57, %v57
    %v100 = vunpack.c.l.s4 1983009808
    %v101 = vunpack.c.0.s8 %v100
    %v102 = vlaneseq
    %v103 = vshrl.u32 %v102, 7
    %v104 = vsub.s32 %v101, %v103
    %v105 = vrot.slane %v57, %v104
    %v107 = vunpack.c.l.s4 1983009808
    %v108 = vunpack.c.0.s8 %v107
    %v109 = vlaneseq
    %v110 = vshrl.u32 %v109, 7
    %v111 = vsub.s32 %v108, %v110
    %v112 = vrot.slane %v98, %v111
    %v113 = vcombine.high %v105, %v105
    %v114 = vcombine.high %v112, %v112
    %vm115 = vcmask 23552
    %v117 = vsel %vm115, %v96, 0
    %vm119 = vcmask 1040384
    %vm120 = vcmask 1041408
    %v121 = vsel %vm119, 4294967295, 65535
    %v122 = vsel %vm120, %v121, 0
    %v124 = vand.u32 %v105, %v122
    %v127 = vand.u32 %v113, %v122
    %v130 = vand.u32 %v112, %v122
    %v133 = vand.u32 %v114, %v122
    %135 = vmatprep.subr.bf16.mxu0 %v127
    %136 = vmatpush1.bf16.msra.mxu0 %v124
    %137 = vmatprep.subr.bf16.mxu0 0
    %138 = vmatpush1.bf16.msra.mxu0 0
    %139 = vmatprep.subr.bf16.mxu0 0
    %140 = vmatpush1.bf16.msra.mxu0 0
    %141 = vmatprep.subr.bf16.mxu0 0
    %142 = vmatpush1.bf16.msra.mxu0 0
    %143 = vmatprep.subr.bf16.mxu0 0
    %144 = vmatpush1.bf16.msra.mxu0 0
    %145 = vmatprep.subr.bf16.mxu0 0
    %146 = vmatpush1.bf16.msra.mxu0 0
    %147 = vmatprep.subr.bf16.mxu0 0
    %148 = vmatpush1.bf16.msra.mxu0 0
    %149 = vmatprep.subr.bf16.mxu0 0
    %150 = vmatpush1.bf16.msra.mxu0 0
    %151 = vmatprep.subr.bf16.mxu0 0
    %152 = vmatpush1.bf16.msra.mxu0 0
    %153 = vmatprep.subr.bf16.mxu0 0
    %154 = vmatpush1.bf16.msra.mxu0 0
    %155 = vmatprep.subr.bf16.mxu0 0
    %156 = vmatpush1.bf16.msra.mxu0 0
    %157 = vmatprep.subr.bf16.mxu0 0
    %158 = vmatpush1.bf16.msra.mxu0 0
    %159 = vmatprep.subr.bf16.mxu0 0
    %160 = vmatpush1.bf16.msra.mxu0 0
    %161 = vmatprep.subr.bf16.mxu0 0
    %162 = vmatpush1.bf16.msra.mxu0 0
    %163 = vmatprep.subr.bf16.mxu0 0
    %164 = vmatpush1.bf16.msra.mxu0 0
    %165 = vmatprep.subr.bf16.mxu0 0
    %166 = vmatpush1.bf16.msra.mxu0 0
    %167 = vmatprep.mubr.bf16.mxu0 0
    %168 = vmatmul.mubr.bf16.gmra.mrb[0].mxu0 %v117
    %v169 = vpop.f32.mrb[0].mxu0
    %v170 = vadd.f32 %v63, %v169
    %v171 = vpop.f32.mrb[0].mxu0
    %v172 = vadd.f32 %v67, %v171
    %v173 = vpop.f32.mrb[0].mxu0
    %v174 = vpop.f32.mrb[0].mxu0
    %175 = vdwg.mxu0
    %176 = vmatprep.subr.bf16.mxu0 %v133
    %177 = vmatpush1.bf16.msra.mxu0 %v130
    %178 = vmatprep.subr.bf16.mxu0 0
    %179 = vmatpush1.bf16.msra.mxu0 0
    %180 = vmatprep.subr.bf16.mxu0 0
    %181 = vmatpush1.bf16.msra.mxu0 0
    %182 = vmatprep.subr.bf16.mxu0 0
    %183 = vmatpush1.bf16.msra.mxu0 0
    %184 = vmatprep.subr.bf16.mxu0 0
    %185 = vmatpush1.bf16.msra.mxu0 0
    %186 = vmatprep.subr.bf16.mxu0 0
    %187 = vmatpush1.bf16.msra.mxu0 0
    %188 = vmatprep.subr.bf16.mxu0 0
    %189 = vmatpush1.bf16.msra.mxu0 0
    %190 = vmatprep.subr.bf16.mxu0 0
    %191 = vmatpush1.bf16.msra.mxu0 0
    %192 = vmatprep.subr.bf16.mxu0 0
    %193 = vmatpush1.bf16.msra.mxu0 0
    %194 = vmatprep.subr.bf16.mxu0 0
    %195 = vmatpush1.bf16.msra.mxu0 0
    %196 = vmatprep.subr.bf16.mxu0 0
    %197 = vmatpush1.bf16.msra.mxu0 0
    %198 = vmatprep.subr.bf16.mxu0 0
    %199 = vmatpush1.bf16.msra.mxu0 0
    %200 = vmatprep.subr.bf16.mxu0 0
    %201 = vmatpush1.bf16.msra.mxu0 0
    %202 = vmatprep.subr.bf16.mxu0 0
    %203 = vmatpush1.bf16.msra.mxu0 0
    %204 = vmatprep.subr.bf16.mxu0 0
    %205 = vmatpush1.bf16.msra.mxu0 0
    %206 = vmatprep.subr.bf16.mxu0 0
    %207 = vmatpush1.bf16.msra.mxu0 0
    %208 = vmatprep.mubr.bf16.mxu0 0
    %209 = vmatmul.mubr.bf16.gmra.mrb[0].mxu0 %v117
    %v210 = vpop.f32.mrb[0].mxu0
    %v211 = vadd.f32 %v71, %v210
    %v212 = vpop.f32.mrb[0].mxu0
    %v213 = vadd.f32 %v75, %v212
    %v214 = vpop.f32.mrb[0].mxu0
    %v215 = vpop.f32.mrb[0].mxu0
    %216 = vdwg.mxu0
    %v217 = vmax.f32 %v170, 0.0
    %v218 = vmax.f32 %v172, 0.0
    %v219 = vmax.f32 %v211, 0.0
    %v220 = vmax.f32 %v213, 0.0
    %v221 = vpack.c.bf16 %v217, %v217
    %v222 = vpack.c.bf16 %v218, %v218
    %v223 = vpack.c.bf16 %v219, %v219
    %v224 = vpack.c.bf16 %v220, %v220
    %v225 = vld [vmem:[%s3] sm:$0xf]
    %v226 = vld [vmem:[%s3 + $0x4] sm:$0xf]
    %v227 = vld [vmem:[%s3 + $0x8] sm:$0xf]
    %v228 = vld [vmem:[%s3 + $0xc] sm:$0xf]
    %v229 = vld [vmem:[%s3 + $0x10] sm:$0xf]
    %v230 = vld [vmem:[%s3 + $0x14] sm:$0xf]
    %v231 = vld [vmem:[%s3 + $0x18] sm:$0xf]
    %v232 = vld [vmem:[%s3 + $0x1c] sm:$0xf]
    %v233 = vld [vmem:[%s3 + $0x20] sm:$0xf]
    %v234 = vld [vmem:[%s3 + $0x24] sm:$0xf]
    %v235 = vld [vmem:[%s3 + $0x28] sm:$0xf]
    %v236 = vld [vmem:[%s3 + $0x2c] sm:$0xf]
    %v237 = vld [vmem:[%s3 + $0x30] sm:$0xf]
    %v238 = vld [vmem:[%s3 + $0x34] sm:$0xf]
    %v239 = vld [vmem:[%s3 + $0x38] sm:$0xf]
    %v240 = vld [vmem:[%s3 + $0x3c] sm:$0xf]
    %v241 = vld [vmem:[%s3 + $0x40] sm:$0xf]
    %v242 = vld [vmem:[%s3 + $0x44] sm:$0xf]
    %v243 = vld [vmem:[%s3 + $0x48] sm:$0xf]
    %v244 = vld [vmem:[%s3 + $0x4c] sm:$0xf]
    %v245 = vld [vmem:[%s3 + $0x50] sm:$0xf]
    %v246 = vld [vmem:[%s3 + $0x54] sm:$0xf]
    %v247 = vld [vmem:[%s3 + $0x58] sm:$0xf]
    %v248 = vld [vmem:[%s3 + $0x5c] sm:$0xf]
    %v249 = vld [vmem:[%s3 + $0x60] sm:$0xf]
    %v250 = vld [vmem:[%s3 + $0x64] sm:$0xf]
    %v251 = vld [vmem:[%s3 + $0x68] sm:$0xf]
    %v252 = vld [vmem:[%s3 + $0x6c] sm:$0xf]
    %v253 = vld [vmem:[%s3 + $0x70] sm:$0xf]
    %v254 = vld [vmem:[%s3 + $0x74] sm:$0xf]
    %v255 = vld [vmem:[%s3 + $0x78] sm:$0xf]
    %v256 = vld [vmem:[%s3 + $0x7c] sm:$0xf]
    %v257 = vld [vmem:[%s3 + $0x80] sm:$0xf]
    %v258 = vld [vmem:[%s3 + $0x84] sm:$0xf]
    %v259 = vld [vmem:[%s3 + $0x88] sm:$0xf]
    %v260 = vld [vmem:[%s3 + $0x8c] sm:$0xf]
    %v261 = vld [vmem:[%s3 + $0x90] sm:$0xf]
    %v262 = vld [vmem:[%s3 + $0x94] sm:$0xf]
    %v263 = vld [vmem:[%s3 + $0x98] sm:$0xf]
    %v264 = vld [vmem:[%s3 + $0x9c] sm:$0xf]
    %v265 = vld [vmem:[%s3 + $0xa0] sm:$0xf]
    %v266 = vld [vmem:[%s3 + $0xa4] sm:$0xf]
    %v267 = vld [vmem:[%s3 + $0xa8] sm:$0xf]
    %v268 = vld [vmem:[%s3 + $0xac] sm:$0xf]
    %v269 = vld [vmem:[%s3 + $0xb0] sm:$0xf]
    %v270 = vld [vmem:[%s3 + $0xb4] sm:$0xf]
    %v271 = vld [vmem:[%s3 + $0xb8] sm:$0xf]
    %v272 = vld [vmem:[%s3 + $0xbc] sm:$0xf]
    %v273 = vld [vmem:[%s3 + $0xc0] sm:$0xf]
    %v274 = vld [vmem:[%s3 + $0xc4] sm:$0xf]
    %v275 = vld [vmem:[%s3 + $0xc8] sm:$0xf]
    %v276 = vld [vmem:[%s3 + $0xcc] sm:$0xf]
    %v277 = vld [vmem:[%s3 + $0xd0] sm:$0xf]
    %v278 = vld [vmem:[%s3 + $0xd4] sm:$0xf]
    %v279 = vld [vmem:[%s3 + $0xd8] sm:$0xf]
    %v280 = vld [vmem:[%s3 + $0xdc] sm:$0xf]
    %v281 = vld [vmem:[%s3 + $0xe0] sm:$0xf]
    %v282 = vld [vmem:[%s3 + $0xe4] sm:$0xf]
    %v283 = vld [vmem:[%s3 + $0xe8] sm:$0xf]
    %v284 = vld [vmem:[%s3 + $0xec] sm:$0xf]
    %v285 = vld [vmem:[%s3 + $0xf0] sm:$0xf]
    %v286 = vld [vmem:[%s3 + $0xf4] sm:$0xf]
    %v287 = vld [vmem:[%s3 + $0xf8] sm:$0xf]
    %v288 = vld [vmem:[%s3 + $0xfc] sm:$0xf]
    %v289 = vld [vmem:[%s4] sm:$0x1]
    %v291 = vlaneseq
    %v292 = vshrl.u32 %v291, 7
    %v293 = vsub.s32 0, %v292
    %v294 = vrot.slane %v289, %v293
    %v360 = vunpack.c.l.b16 %v225
    %v361 = vunpack.c.l.b16 %v226
    %v362 = vunpack.c.l.b16 %v227
    %v363 = vunpack.c.l.b16 %v228
    %v364 = vunpack.c.l.b16 %v229
    %v365 = vunpack.c.l.b16 %v230
    %v366 = vunpack.c.l.b16 %v231
    %v367 = vunpack.c.l.b16 %v232
    %v368 = vunpack.c.l.b16 %v233
    %v369 = vunpack.c.l.b16 %v234
    %v370 = vunpack.c.l.b16 %v235
    %v371 = vunpack.c.l.b16 %v236
    %v372 = vunpack.c.l.b16 %v237
    %v373 = vunpack.c.l.b16 %v238
    %v374 = vunpack.c.l.b16 %v239
    %v375 = vunpack.c.l.b16 %v240
    %v376 = vunpack.c.l.b16 %v241
    %v377 = vunpack.c.l.b16 %v242
    %v378 = vunpack.c.l.b16 %v243
    %v379 = vunpack.c.l.b16 %v244
    %v380 = vunpack.c.l.b16 %v245
    %v381 = vunpack.c.l.b16 %v246
    %v382 = vunpack.c.l.b16 %v247
    %v383 = vunpack.c.l.b16 %v248
    %v384 = vunpack.c.l.b16 %v249
    %v385 = vunpack.c.l.b16 %v250
    %v386 = vunpack.c.l.b16 %v251
    %v387 = vunpack.c.l.b16 %v252
    %v388 = vunpack.c.l.b16 %v253
    %v389 = vunpack.c.l.b16 %v254
    %v390 = vunpack.c.l.b16 %v255
    %v391 = vunpack.c.l.b16 %v256
    %v392 = vunpack.c.l.b16 %v257
    %v393 = vunpack.c.l.b16 %v258
    %v394 = vunpack.c.l.b16 %v259
    %v395 = vunpack.c.l.b16 %v260
    %v396 = vunpack.c.l.b16 %v261
    %v397 = vunpack.c.l.b16 %v262
    %v398 = vunpack.c.l.b16 %v263
    %v399 = vunpack.c.l.b16 %v264
    %v400 = vunpack.c.l.b16 %v265
    %v401 = vunpack.c.l.b16 %v266
    %v402 = vunpack.c.l.b16 %v267
    %v403 = vunpack.c.l.b16 %v268
    %v404 = vunpack.c.l.b16 %v269
    %v405 = vunpack.c.l.b16 %v270
    %v406 = vunpack.c.l.b16 %v271
    %v407 = vunpack.c.l.b16 %v272
    %v408 = vunpack.c.l.b16 %v273
    %v409 = vunpack.c.l.b16 %v274
    %v410 = vunpack.c.l.b16 %v275
    %v411 = vunpack.c.l.b16 %v276
    %v412 = vunpack.c.l.b16 %v277
    %v413 = vunpack.c.l.b16 %v278
    %v414 = vunpack.c.l.b16 %v279
    %v415 = vunpack.c.l.b16 %v280
    %v416 = vunpack.c.l.b16 %v281
    %v417 = vunpack.c.l.b16 %v282
    %v418 = vunpack.c.l.b16 %v283
    %v419 = vunpack.c.l.b16 %v284
    %v420 = vunpack.c.l.b16 %v285
    %v421 = vunpack.c.l.b16 %v286
    %v422 = vunpack.c.l.b16 %v287
    %v423 = vunpack.c.l.b16 %v288
    %v424 = vpack.c.b16 %v361, %v360
    %v425 = vpack.c.b16 %v363, %v362
    %v426 = vpack.c.b16 %v365, %v364
    %v427 = vpack.c.b16 %v367, %v366
    %v428 = vpack.c.b16 %v369, %v368
    %v429 = vpack.c.b16 %v371, %v370
    %v430 = vpack.c.b16 %v373, %v372
    %v431 = vpack.c.b16 %v375, %v374
    %v432 = vpack.c.b16 %v377, %v376
    %v433 = vpack.c.b16 %v379, %v378
    %v434 = vpack.c.b16 %v381, %v380
    %v435 = vpack.c.b16 %v383, %v382
    %v436 = vpack.c.b16 %v385, %v384
    %v437 = vpack.c.b16 %v387, %v386
    %v438 = vpack.c.b16 %v389, %v388
    %v439 = vpack.c.b16 %v391, %v390
    %v440 = vpack.c.b16 %v393, %v392
    %v441 = vpack.c.b16 %v395, %v394
    %v442 = vpack.c.b16 %v397, %v396
    %v443 = vpack.c.b16 %v399, %v398
    %v444 = vpack.c.b16 %v401, %v400
    %v445 = vpack.c.b16 %v403, %v402
    %v446 = vpack.c.b16 %v405, %v404
    %v447 = vpack.c.b16 %v407, %v406
    %v448 = vpack.c.b16 %v409, %v408
    %v449 = vpack.c.b16 %v411, %v410
    %v450 = vpack.c.b16 %v413, %v412
    %v451 = vpack.c.b16 %v415, %v414
    %v452 = vpack.c.b16 %v417, %v416
    %v453 = vpack.c.b16 %v419, %v418
    %v454 = vpack.c.b16 %v421, %v420
    %v455 = vpack.c.b16 %v423, %v422
    %488 = vmatprep.subr.bf16.mxu0 0
    %489 = vmatpush1.bf16.msra.mxu0 %v424
    %490 = vmatprep.subr.bf16.mxu0 0
    %491 = vmatpush1.bf16.msra.mxu0 %v425
    %492 = vmatprep.subr.bf16.mxu0 0
    %493 = vmatpush1.bf16.msra.mxu0 %v426
    %494 = vmatprep.subr.bf16.mxu0 0
    %495 = vmatpush1.bf16.msra.mxu0 %v427
    %496 = vmatprep.subr.bf16.mxu0 0
    %497 = vmatpush1.bf16.msra.mxu0 %v428
    %498 = vmatprep.subr.bf16.mxu0 0
    %499 = vmatpush1.bf16.msra.mxu0 %v429
    %500 = vmatprep.subr.bf16.mxu0 0
    %501 = vmatpush1.bf16.msra.mxu0 %v430
    %502 = vmatprep.subr.bf16.mxu0 0
    %503 = vmatpush1.bf16.msra.mxu0 %v431
    %504 = vmatprep.subr.bf16.mxu0 0
    %505 = vmatpush1.bf16.msra.mxu0 %v432
    %506 = vmatprep.subr.bf16.mxu0 0
    %507 = vmatpush1.bf16.msra.mxu0 %v433
    %508 = vmatprep.subr.bf16.mxu0 0
    %509 = vmatpush1.bf16.msra.mxu0 %v434
    %510 = vmatprep.subr.bf16.mxu0 0
    %511 = vmatpush1.bf16.msra.mxu0 %v435
    %512 = vmatprep.subr.bf16.mxu0 0
    %513 = vmatpush1.bf16.msra.mxu0 %v436
    %514 = vmatprep.subr.bf16.mxu0 0
    %515 = vmatpush1.bf16.msra.mxu0 %v437
    %516 = vmatprep.subr.bf16.mxu0 0
    %517 = vmatpush1.bf16.msra.mxu0 %v438
    %518 = vmatprep.subr.bf16.mxu0 0
    %519 = vmatpush1.bf16.msra.mxu0 %v439
    %520 = vmatprep.mubr.bf16.mxu0 %v222
    %521 = vmatmul.mubr.bf16.gmra.mrb[0].mxu0 %v221
    %v522 = vpop.f32.mrb[0].mxu0
    %v523 = vadd.f32 %v294, %v522
    %v524 = vpop.f32.mrb[0].mxu0
    %v525 = vpop.f32.mrb[0].mxu0
    %v526 = vpop.f32.mrb[0].mxu0
    %527 = vdwg.mxu0
    %528 = vmatprep.subr.bf16.mxu0 0
    %529 = vmatpush1.bf16.msra.mxu0 %v440
    %530 = vmatprep.subr.bf16.mxu0 0
    %531 = vmatpush1.bf16.msra.mxu0 %v441
    %532 = vmatprep.subr.bf16.mxu0 0
    %533 = vmatpush1.bf16.msra.mxu0 %v442
    %534 = vmatprep.subr.bf16.mxu0 0
    %535 = vmatpush1.bf16.msra.mxu0 %v443
    %536 = vmatprep.subr.bf16.mxu0 0
    %537 = vmatpush1.bf16.msra.mxu0 %v444
    %538 = vmatprep.subr.bf16.mxu0 0
    %539 = vmatpush1.bf16.msra.mxu0 %v445
    %540 = vmatprep.subr.bf16.mxu0 0
    %541 = vmatpush1.bf16.msra.mxu0 %v446
    %542 = vmatprep.subr.bf16.mxu0 0
    %543 = vmatpush1.bf16.msra.mxu0 %v447
    %544 = vmatprep.subr.bf16.mxu0 0
    %545 = vmatpush1.bf16.msra.mxu0 %v448
    %546 = vmatprep.subr.bf16.mxu0 0
    %547 = vmatpush1.bf16.msra.mxu0 %v449
    %548 = vmatprep.subr.bf16.mxu0 0
    %549 = vmatpush1.bf16.msra.mxu0 %v450
    %550 = vmatprep.subr.bf16.mxu0 0
    %551 = vmatpush1.bf16.msra.mxu0 %v451
    %552 = vmatprep.subr.bf16.mxu0 0
    %553 = vmatpush1.bf16.msra.mxu0 %v452
    %554 = vmatprep.subr.bf16.mxu0 0
    %555 = vmatpush1.bf16.msra.mxu0 %v453
    %556 = vmatprep.subr.bf16.mxu0 0
    %557 = vmatpush1.bf16.msra.mxu0 %v454
    %558 = vmatprep.subr.bf16.mxu0 0
    %559 = vmatpush1.bf16.msra.mxu0 %v455
    %560 = vmatprep.mubr.bf16.mxu0 %v224
    %561 = vmatmul.mubr.bf16.gmra.mrb[0].mxu0 %v223
    %v562 = vpop.f32.mrb[0].mxu0
    %v563 = vadd.f32 %v523, %v562
    %v564 = vpop.f32.mrb[0].mxu0
    %v565 = vpop.f32.mrb[0].mxu0
    %v566 = vpop.f32.mrb[0].mxu0
    %567 = vdwg.mxu0
    %568 = vst [vmem:[#allocation2] sm:$0x3] %v563
    // Predicated region
    $region22: #{classification_model.1} parent=1 // pred_check
      _
    $region23: #{classification_model.1} parent=1 // pred_check_branch
      %570 = sbr.rel (0) target = $region25
    $region24: #{classification_model.1} parent=1 // pred_region
      %s572 = ssub.s32 32, 32
      %573 = vsyncadd [#allocation3], %s572
      %s575 = sshll.u32 [#allocation2], 4
      %s576 = int_to_ptr.vmem [resolvable:$true] %s575
      %578 = dma.vmem_to_hbm [thread:$0]  %s576, 32, %s5, [#allocation3]
    $region25: #{classification_model.1} parent=1 // pred_fallthru
      _
    // Predicated region
    $region26: #{classification_model.1} parent=1 // pred_check
      _
    $region27: #{classification_model.1} parent=1 // pred_check_branch
      %580 = sbr.rel (0) target = $region29
    $region28: #{classification_model.1} parent=1 // pred_region
      %581 = dma.done [#allocation3], 32
    $region29: #{classification_model.1} parent=1 // pred_fallthru
      _
    %582 = vsyncpa [#allocation3], 1

</llo_original>
